<compile_context>
chip_gen: v7x
topology: tpu7x:2x2x1
jax: 0.10.0
libtpu: 0.0.40
codegen_flags: <defaults>
</compile_context>

<pallas_src>
import functools

import jax
import jax.numpy as jnp
from jax import lax
from jax.experimental import pallas as pl
from jax.experimental.pallas import tpu as pltpu


# ----------------------------------------------------------------------------
# In-kernel im2col staging (shared by both kernels)
# ----------------------------------------------------------------------------
def _stage_cols(xb_ref, mask_ref, cols_ref, *, ks, padding, tile_rows, width, cin):
    """Build the (ks*ks*cin, L) im2col columns in VMEM from the padded band.

    xb_ref  : (cin, FLAT)  flattened height-padded band with `padding` guards
    mask_ref: (ks, L)      horizontal validity mask per kw (bf16 0/1)
    cols_ref: (ks*ks*cin, L) bf16 scratch
    """
    L = tile_rows * width
    # Hoist the mask broadcasts out of the tap loop (broadcast_in_dim is not CSE'd).
    bmask = {}
    for kw in range(ks):
        if kw != padding:
            bmask[kw] = jnp.broadcast_to(mask_ref[kw:kw + 1, :], (cin, L))
    t = 0
    for kh in range(ks):
        for kw in range(ks):
            start = kh * width + kw                    # static lane offset
            tap = xb_ref[:, start:start + L]           # (cin, L) bf16
            if kw != padding:                          # zero wrap-around taps
                tap = tap * bmask[kw]
            cols_ref[t * cin:(t + 1) * cin, :] = tap   # 16-row aligned store
            t += 1


def _conv_stats_kernel(xb_ref, w_ref, mask_ref, stats_ref, cols_ref, *,
                       ks, padding, tile_rows, width, cin):
    """Pass 1: conv (single folded-K MXU matmul) -> packed BN partial stats."""
    _stage_cols(xb_ref, mask_ref, cols_ref, ks=ks, padding=padding,
                tile_rows=tile_rows, width=width, cin=cin)
    y = jnp.dot(w_ref[...], cols_ref[...], preferred_element_type=jnp.float32)
    s = jnp.sum(y, axis=1, keepdims=True)              # (Cout, 1)
    q = jnp.sum(y * y, axis=1, keepdims=True)          # (Cout, 1)
    stats_ref[...] = jnp.concatenate([s, q], axis=1)   # (Cout, 2)


def _conv_bn_relu_kernel(xb_ref, w_ref, mask_ref, scale_ref, shift_ref, o_ref,
                         cols_ref, *, ks, padding, tile_rows, width, cin):
    """Pass 2: recompute conv from the band, fuse BN affine + ReLU, write out."""
    _stage_cols(xb_ref, mask_ref, cols_ref, ks=ks, padding=padding,
                tile_rows=tile_rows, width=width, cin=cin)
    y = jnp.dot(w_ref[...], cols_ref[...], preferred_element_type=jnp.float32)
    z = y * scale_ref[...] + shift_ref[...]
    o_ref[...] = jnp.maximum(z, 0.0).astype(o_ref.dtype)


# ----------------------------------------------------------------------------
# Generation-aware tile sizing
# ----------------------------------------------------------------------------
def _vmem_limit_bytes():
    cap = 64 * 1024 * 1024                       # conservative default (v7x)
    try:
        cap = int(pltpu.get_tpu_info().vmem_capacity_bytes)
    except Exception:
        pass
    # ~48 MiB on v7x (64 MiB VMEM), capped at 100 MiB on v5e/v6e (128 MiB VMEM).
    return min(cap * 3 // 4, 100 * 1024 * 1024)


def _tile_bytes(tile_rows, *, W, ks, padding, cin_p, cout, T):
    """VMEM byte model for one grid step of the fused kernel (the larger one)."""
    L = tile_rows * W
    FLAT = (tile_rows + ks - 1) * W + 2 * padding
    b = 0
    b += 2 * cin_p * FLAT * 2            # xb band (bf16), double-buffered
    b += 2 * cout * T * cin_p * 2        # folded weights (bf16)
    b += 2 * ks * L * 2                  # masks (bf16)
    b += 2 * cout * L * 4                # f32 output block, double-buffered
    b += T * cin_p * L * 2               # cols scratch (bf16)
    b += 2 * cout * L * 4                # matmul result / affine intermediates
    b += 2 * cin_p * L * 2               # hoisted broadcast masks
    b += 4 * cout * 4                    # scale / shift
    return b


def _pick_row_tile(H, W, N, bytes_fn, budget):
    """Largest row band that fits the VMEM budget; prefer lane-dense tiles
    (TH*W % 128 == 0) and >= ~4 grid steps (pipeline / v7x 2-TC feed)."""
    divs = [d for d in range(1, H + 1) if H % d == 0]
    feasible = [d for d in divs if bytes_fn(d) <= budget]
    lane_dense = [d for d in feasible if (d * W) % 128 == 0]

    def pick(cands):
        if not cands:
            return None
        enough_steps = [d for d in cands if N * (H // d) >= 4]
        return max(enough_steps) if enough_steps else max(cands)

    th = pick(lane_dense) or pick(feasible)
    # TODO(synk): ragged last band (pl.cdiv grid + tail mask) so a lane-dense
    # tile exists even when no divisor of H gives (TH*W) % 128 == 0.
    return th if th is not None else 1


# ----------------------------------------------------------------------------
# Wrapper
# ----------------------------------------------------------------------------
def conv_bn_relu(x_nchw, weight_oihw, gamma, beta, *,
                 ks=3, stride=1, padding=1, eps=1e-5):
    assert stride == 1, "kernel implemented for stride=1 (module default)"
    assert 2 * padding == ks - 1, "kernel implemented for 'same' conv (module default)"
    # TODO(synk): general stride / non-'same' padding would need a strided tap gather.
    N, Cin, H, W = x_nchw.shape
    Cout = weight_oihw.shape[0]
    T = ks * ks
    HW = H * W

    Cin_p = ((Cin + 15) // 16) * 16          # bf16 sublane-tile alignment (16)

    vmem_limit = _vmem_limit_bytes()
    budget = int(vmem_limit * 0.6)
    bytes_fn = functools.partial(_tile_bytes, W=W, ks=ks, padding=padding,
                                 cin_p=Cin_p, cout=Cout, T=T)
    TH = _pick_row_tile(H, W, N, bytes_fn, budget)   # output rows per band
    HT = H // TH
    THp = TH + ks - 1                        # padded rows one band needs
    L = TH * W                               # lanes per output tile
    FLAT = THp * W + 2 * padding             # flat band length incl. guard elems

    # ---- glue: one height-padded copy, split into row bands with a (ks-1)-row
    # halo, flattened, plus `padding` guard elements so every tap is a static
    # contiguous lane slice inside the kernel.  bf16 to halve HBM/DMA bytes.
    x = x_nchw.astype(jnp.bfloat16)
    if Cin_p != Cin:
        x = jnp.pad(x, ((0, 0), (0, Cin_p - Cin), (0, 0), (0, 0)))
    xph = jnp.pad(x, ((0, 0), (0, 0), (padding, padding), (0, 0)))
    flat = xph.reshape(N, Cin_p, (H + 2 * padding) * W)
    bands = jnp.stack([flat[:, :, h * TH * W: h * TH * W + THp * W]
                       for h in range(HT)], axis=1)             # (N,HT,Cin_p,THp*W)
    xb = jnp.pad(bands, ((0, 0), (0, 0), (0, 0), (padding, padding)))   # (...,FLAT)
    # TODO(synk): replace the band-stack glue with an in-kernel halo DMA
    # (memory_space=pl.ANY + pltpu.make_async_copy) to drop the extra input copy.

    # weights: OIHW -> (Cout, T*Cin_p); column order (kh, kw, cin) matches cols.
    w4 = weight_oihw.astype(jnp.bfloat16)
    if Cin_p != Cin:
        w4 = jnp.pad(w4, ((0, 0), (0, Cin_p - Cin), (0, 0), (0, 0)))
    w_mat = jnp.transpose(w4, (0, 2, 3, 1)).reshape(Cout, T * Cin_p)

    # horizontal edge mask per kw (replaces width zero-padding); exact 0/1 in bf16.
    col = jnp.arange(L, dtype=jnp.int32) % W
    masks = jnp.stack(
        [((col + kw - padding >= 0) & (col + kw - padding < W)).astype(jnp.bfloat16)
         for kw in range(ks)], axis=0)                           # (ks, L)

    common = dict(ks=ks, padding=padding, tile_rows=TH, width=W, cin=Cin_p)
    stats_kernel = functools.partial(_conv_stats_kernel, **common)
    fused_kernel = functools.partial(_conv_bn_relu_kernel, **common)

    cparams = pltpu.CompilerParams(
        dimension_semantics=("parallel", "parallel"),
        vmem_limit_bytes=vmem_limit)

    xb_spec = pl.BlockSpec((None, None, Cin_p, FLAT), lambda n, h: (n, h, 0, 0))
    w_spec = pl.BlockSpec((Cout, T * Cin_p), lambda n, h: (0, 0))
    m_spec = pl.BlockSpec((ks, L), lambda n, h: (0, 0))

    # ---- kernel 1: conv (folded-K matmul) -> packed partial BN statistics ----
    stats = pl.pallas_call(
        stats_kernel,
        out_shape=jax.ShapeDtypeStruct((N, HT, Cout, 2), jnp.float32),
        grid_spec=pltpu.PrefetchScalarGridSpec(
            num_scalar_prefetch=0,
            grid=(N, HT),
            in_specs=[xb_spec, w_spec, m_spec],
            out_specs=pl.BlockSpec((None, None, Cout, 2), lambda n, h: (n, h, 0, 0)),
            scratch_shapes=[pltpu.VMEM((T * Cin_p, L), jnp.bfloat16)]),
        compiler_params=cparams,
    )(xb, w_mat, masks)

    # ---- BatchNorm2d training-mode batch statistics (biased variance) --------
    count = jnp.float32(N * HW)
    csum = jnp.sum(stats[..., 0:1], axis=(0, 1))          # (Cout, 1)
    csq = jnp.sum(stats[..., 1:2], axis=(0, 1))           # (Cout, 1)
    mean = csum / count
    var = jnp.maximum(csq / count - mean * mean, 0.0)      # clamp f32 cancellation
    inv = lax.rsqrt(var + eps)
    scale = gamma.reshape(Cout, 1).astype(jnp.float32) * inv
    shift = beta.reshape(Cout, 1).astype(jnp.float32) - mean * scale

    # ---- kernel 2: recompute conv + fused BN affine + ReLU (no y round-trip) --
    out = pl.pallas_call(
        fused_kernel,
        out_shape=jax.ShapeDtypeStruct((N, Cout, HW), jnp.float32),
        grid_spec=pltpu.PrefetchScalarGridSpec(
            num_scalar_prefetch=0,
            grid=(N, HT),
            in_specs=[xb_spec, w_spec, m_spec,
                      pl.BlockSpec((Cout, 1), lambda n, h: (0, 0)),
                      pl.BlockSpec((Cout, 1), lambda n, h: (0, 0))],
            out_specs=pl.BlockSpec((None, Cout, L), lambda n, h: (n, 0, h)),
            scratch_shapes=[pltpu.VMEM((T * Cin_p, L), jnp.bfloat16)]),
        compiler_params=cparams,
    )(xb, w_mat, masks, scale, shift)

    return out.reshape(N, Cout, H, W)     # back to NCHW


# ----------------------------------------------------------------------------
# Reference & test
# ----------------------------------------------------------------------------
def _reference(x, weight, gamma, beta, eps=1e-5):
    y = lax.conv_general_dilated(
        x, weight, window_strides=(1, 1), padding=((1, 1), (1, 1)),
        dimension_numbers=("NCHW", "OIHW", "NCHW"),
        precision=lax.Precision.HIGHEST)
    mean = jnp.mean(y, axis=(0, 2, 3), keepdims=True)
    var = jnp.mean((y - mean) ** 2, axis=(0, 2, 3), keepdims=True)
    return jnp.maximum(
        (y - mean) * lax.rsqrt(var + eps) * gamma.reshape(1, -1, 1, 1)
        + beta.reshape(1, -1, 1, 1), 0.0)


if __name__ == "__main__":
    key = jax.random.PRNGKey(0)

    configs = [
        dict(N=2, Cin=4, Cout=8, H=16, W=16),    # small module-default shapes
        dict(N=1, Cin=3, Cout=16, H=64, W=64),   # exercises multi-band (HT>1) path
    ]
    for i, cfg in enumerate(configs):
        k1, k2, k3, k4, key = jax.random.split(key, 5)
        N, Cin, Cout, H, W = cfg["N"], cfg["Cin"], cfg["Cout"], cfg["H"], cfg["W"]

        x = jax.random.normal(k1, (N, Cin, H, W), jnp.float32)
        weight = 0.1 * jax.random.normal(k2, (Cout, Cin, 3, 3), jnp.float32)
        gamma = 1.0 + 0.1 * jax.random.normal(k3, (Cout,), jnp.float32)
        beta = 0.1 * jax.random.normal(k4, (Cout,), jnp.float32)

        out = jax.block_until_ready(conv_bn_relu(x, weight, gamma, beta))

        # Reference with the same bf16 operand rounding (accumulation stays f32),
        # isolating kernel-algorithm error from the intentional dtype rounding.
        xq = x.astype(jnp.bfloat16).astype(jnp.float32)
        wq = weight.astype(jnp.bfloat16).astype(jnp.float32)
        ref = _reference(xq, wq, gamma, beta)

        assert out.shape == ref.shape == (N, Cout, H, W)
        max_err = float(jnp.max(jnp.abs(out - ref)))
        assert jnp.allclose(out, ref, rtol=5e-3, atol=5e-3), \
            f"config {i}: max_err={max_err}"

    print("KERNEL_OK")
</pallas_src>

<mosaic_0001>
module attributes {stable_mosaic.version = 11 : i64} {
  func.func @_conv_stats_kernel(%arg0: i32, %arg1: i32, %arg2: memref<1x1x16x162xbf16, #tpu.memory_space<vmem>>, %arg3: memref<8x144xbf16, #tpu.memory_space<vmem>>, %arg4: memref<3x128xbf16, #tpu.memory_space<vmem>>, %arg5: memref<1x1x8x2xf32, #tpu.memory_space<vmem>>, %arg6: memref<144x128xbf16, #tpu.memory_space<vmem>>) attributes {dimension_semantics = [#tpu.dimension_semantics<parallel>, #tpu.dimension_semantics<parallel>], iteration_bounds = array<i64: 2, 2>, scalar_prefetch = 0 : i64, scratch_operands = 1 : i64, tpu.core_type = #tpu.core_type<tc>, window_params = [{transform_indices = @transform_0, window_bounds = array<i64: 1, 1, 16, 162>}, {pipeline_mode = #tpu.pipeline_mode<synchronous>, transform_indices = @transform_1, window_bounds = array<i64: 8, 144>}, {pipeline_mode = #tpu.pipeline_mode<synchronous>, transform_indices = @transform_2, window_bounds = array<i64: 3, 128>}, {transform_indices = @transform_3, window_bounds = array<i64: 1, 1, 8, 2>}]} {
    %c0 = arith.constant 0 : index
    %c0_0 = arith.constant 0 : index
    %0 = vector.load %arg4[%c0, %c0_0] : memref<3x128xbf16, #tpu.memory_space<vmem>>, vector<1x128xbf16>
    %1 = vector.shape_cast %0 : vector<1x128xbf16> to vector<1x128xbf16>
    %2 = vector.broadcast %1 : vector<1x128xbf16> to vector<16x128xbf16>
    %c2 = arith.constant 2 : index
    %c0_1 = arith.constant 0 : index
    %3 = vector.load %arg4[%c2, %c0_1] : memref<3x128xbf16, #tpu.memory_space<vmem>>, vector<1x128xbf16>
    %4 = vector.shape_cast %3 : vector<1x128xbf16> to vector<1x128xbf16>
    %5 = vector.broadcast %4 : vector<1x128xbf16> to vector<16x128xbf16>
    %c0_2 = arith.constant 0 : index
    %c0_3 = arith.constant 0 : index
    %c0_4 = arith.constant 0 : index
    %c0_5 = arith.constant 0 : index
    %6 = vector.load %arg2[%c0_2, %c0_3, %c0_4, %c0_5] : memref<1x1x16x162xbf16, #tpu.memory_space<vmem>>, vector<1x1x16x128xbf16>
    %7 = vector.shape_cast %6 : vector<1x1x16x128xbf16> to vector<16x128xbf16>
    %8 = arith.mulf %7, %2 : vector<16x128xbf16>
    %c0_6 = arith.constant 0 : index
    %c0_7 = arith.constant 0 : index
    %9 = vector.load %arg6[%c0_6, %c0_7] : memref<144x128xbf16, #tpu.memory_space<vmem>>, vector<16x128xbf16>
    tpu.vector_store %arg6[%c0_6, %c0_7], %8 {strides = array<i32>} : memref<144x128xbf16, #tpu.memory_space<vmem>>, vector<16x128xbf16>,
    %c0_8 = arith.constant 0 : index
    %c0_9 = arith.constant 0 : index
    %c0_10 = arith.constant 0 : index
    %c1 = arith.constant 1 : index
    %10 = vector.load %arg2[%c0_8, %c0_9, %c0_10, %c1] : memref<1x1x16x162xbf16, #tpu.memory_space<vmem>>, vector<1x1x16x128xbf16>
    %11 = vector.shape_cast %10 : vector<1x1x16x128xbf16> to vector<16x128xbf16>
    %c16 = arith.constant 16 : index
    %c0_11 = arith.constant 0 : index
    %12 = vector.load %arg6[%c16, %c0_11] : memref<144x128xbf16, #tpu.memory_space<vmem>>, vector<16x128xbf16>
    tpu.vector_store %arg6[%c16, %c0_11], %11 {strides = array<i32>} : memref<144x128xbf16, #tpu.memory_space<vmem>>, vector<16x128xbf16>,
    %c0_12 = arith.constant 0 : index
    %c0_13 = arith.constant 0 : index
    %c0_14 = arith.constant 0 : index
    %c2_15 = arith.constant 2 : index
    %13 = vector.load %arg2[%c0_12, %c0_13, %c0_14, %c2_15] : memref<1x1x16x162xbf16, #tpu.memory_space<vmem>>, vector<1x1x16x128xbf16>
    %14 = vector.shape_cast %13 : vector<1x1x16x128xbf16> to vector<16x128xbf16>
    %15 = arith.mulf %14, %5 : vector<16x128xbf16>
    %c32 = arith.constant 32 : index
    %c0_16 = arith.constant 0 : index
    %16 = vector.load %arg6[%c32, %c0_16] : memref<144x128xbf16, #tpu.memory_space<vmem>>, vector<16x128xbf16>
    tpu.vector_store %arg6[%c32, %c0_16], %15 {strides = array<i32>} : memref<144x128xbf16, #tpu.memory_space<vmem>>, vector<16x128xbf16>,
    %c0_17 = arith.constant 0 : index
    %c0_18 = arith.constant 0 : index
    %c0_19 = arith.constant 0 : index
    %c16_20 = arith.constant 16 : index
    %17 = vector.load %arg2[%c0_17, %c0_18, %c0_19, %c16_20] : memref<1x1x16x162xbf16, #tpu.memory_space<vmem>>, vector<1x1x16x128xbf16>
    %18 = vector.shape_cast %17 : vector<1x1x16x128xbf16> to vector<16x128xbf16>
    %19 = arith.mulf %18, %2 : vector<16x128xbf16>
    %c48 = arith.constant 48 : index
    %c0_21 = arith.constant 0 : index
    %20 = vector.load %arg6[%c48, %c0_21] : memref<144x128xbf16, #tpu.memory_space<vmem>>, vector<16x128xbf16>
    tpu.vector_store %arg6[%c48, %c0_21], %19 {strides = array<i32>} : memref<144x128xbf16, #tpu.memory_space<vmem>>, vector<16x128xbf16>,
    %c0_22 = arith.constant 0 : index
    %c0_23 = arith.constant 0 : index
    %c0_24 = arith.constant 0 : index
    %c17 = arith.constant 17 : index
    %21 = vector.load %arg2[%c0_22, %c0_23, %c0_24, %c17] : memref<1x1x16x162xbf16, #tpu.memory_space<vmem>>, vector<1x1x16x128xbf16>
    %22 = vector.shape_cast %21 : vector<1x1x16x128xbf16> to vector<16x128xbf16>
    %c64 = arith.constant 64 : index
    %c0_25 = arith.constant 0 : index
    %23 = vector.load %arg6[%c64, %c0_25] : memref<144x128xbf16, #tpu.memory_space<vmem>>, vector<16x128xbf16>
    tpu.vector_store %arg6[%c64, %c0_25], %22 {strides = array<i32>} : memref<144x128xbf16, #tpu.memory_space<vmem>>, vector<16x128xbf16>,
    %c0_26 = arith.constant 0 : index
    %c0_27 = arith.constant 0 : index
    %c0_28 = arith.constant 0 : index
    %c18 = arith.constant 18 : index
    %24 = vector.load %arg2[%c0_26, %c0_27, %c0_28, %c18] : memref<1x1x16x162xbf16, #tpu.memory_space<vmem>>, vector<1x1x16x128xbf16>
    %25 = vector.shape_cast %24 : vector<1x1x16x128xbf16> to vector<16x128xbf16>
    %26 = arith.mulf %25, %5 : vector<16x128xbf16>
    %c80 = arith.constant 80 : index
    %c0_29 = arith.constant 0 : index
    %27 = vector.load %arg6[%c80, %c0_29] : memref<144x128xbf16, #tpu.memory_space<vmem>>, vector<16x128xbf16>
    tpu.vector_store %arg6[%c80, %c0_29], %26 {strides = array<i32>} : memref<144x128xbf16, #tpu.memory_space<vmem>>, vector<16x128xbf16>,
    %c0_30 = arith.constant 0 : index
    %c0_31 = arith.constant 0 : index
    %c0_32 = arith.constant 0 : index
    %c32_33 = arith.constant 32 : index
    %28 = vector.load %arg2[%c0_30, %c0_31, %c0_32, %c32_33] : memref<1x1x16x162xbf16, #tpu.memory_space<vmem>>, vector<1x1x16x128xbf16>
    %29 = vector.shape_cast %28 : vector<1x1x16x128xbf16> to vector<16x128xbf16>
    %30 = arith.mulf %29, %2 : vector<16x128xbf16>
    %c96 = arith.constant 96 : index
    %c0_34 = arith.constant 0 : index
    %31 = vector.load %arg6[%c96, %c0_34] : memref<144x128xbf16, #tpu.memory_space<vmem>>, vector<16x128xbf16>
    tpu.vector_store %arg6[%c96, %c0_34], %30 {strides = array<i32>} : memref<144x128xbf16, #tpu.memory_space<vmem>>, vector<16x128xbf16>,
    %c0_35 = arith.constant 0 : index
    %c0_36 = arith.constant 0 : index
    %c0_37 = arith.constant 0 : index
    %c33 = arith.constant 33 : index
    %32 = vector.load %arg2[%c0_35, %c0_36, %c0_37, %c33] : memref<1x1x16x162xbf16, #tpu.memory_space<vmem>>, vector<1x1x16x128xbf16>
    %33 = vector.shape_cast %32 : vector<1x1x16x128xbf16> to vector<16x128xbf16>
    %c112 = arith.constant 112 : index
    %c0_38 = arith.constant 0 : index
    %34 = vector.load %arg6[%c112, %c0_38] : memref<144x128xbf16, #tpu.memory_space<vmem>>, vector<16x128xbf16>
    tpu.vector_store %arg6[%c112, %c0_38], %33 {strides = array<i32>} : memref<144x128xbf16, #tpu.memory_space<vmem>>, vector<16x128xbf16>,
    %c0_39 = arith.constant 0 : index
    %c0_40 = arith.constant 0 : index
    %c0_41 = arith.constant 0 : index
    %c34 = arith.constant 34 : index
    %35 = vector.load %arg2[%c0_39, %c0_40, %c0_41, %c34] : memref<1x1x16x162xbf16, #tpu.memory_space<vmem>>, vector<1x1x16x128xbf16>
    %36 = vector.shape_cast %35 : vector<1x1x16x128xbf16> to vector<16x128xbf16>
    %37 = arith.mulf %36, %5 : vector<16x128xbf16>
    %c128 = arith.constant 128 : index
    %c0_42 = arith.constant 0 : index
    %38 = vector.load %arg6[%c128, %c0_42] : memref<144x128xbf16, #tpu.memory_space<vmem>>, vector<16x128xbf16>
    tpu.vector_store %arg6[%c128, %c0_42], %37 {strides = array<i32>} : memref<144x128xbf16, #tpu.memory_space<vmem>>, vector<16x128xbf16>,
    %c0_43 = arith.constant 0 : index
    %c0_44 = arith.constant 0 : index
    %39 = vector.load %arg3[%c0_43, %c0_44] : memref<8x144xbf16, #tpu.memory_space<vmem>>, vector<8x144xbf16>
    %c0_45 = arith.constant 0 : index
    %c0_46 = arith.constant 0 : index
    %40 = vector.load %arg6[%c0_45, %c0_46] : memref<144x128xbf16, #tpu.memory_space<vmem>>, vector<144x128xbf16>
    %cst = arith.constant dense<0.000000e+00> : vector<8x128xf32>
    %41 = tpu.matmul %39, %40, %cst {dimension_numbers = #tpu.dot_dimension_numbers<[1], [0], [0], [1], [0, 0, 1, 1], [], []>} : vector<8x144xbf16>, vector<144x128xbf16>, vector<8x128xf32> -> vector<8x128xf32>
    %cst_47 = arith.constant dense<0.000000e+00> : vector<8xf32>
    %42 = vector.multi_reduction <add>, %41, %cst_47 [1] : vector<8x128xf32> to vector<8xf32>
    %43 = vector.shape_cast %42 : vector<8xf32> to vector<8x1xf32>
    %44 = arith.mulf %41, %41 : vector<8x128xf32>
    %cst_48 = arith.constant dense<0.000000e+00> : vector<8xf32>
    %45 = vector.multi_reduction <add>, %44, %cst_48 [1] : vector<8x128xf32> to vector<8xf32>
    %46 = vector.shape_cast %45 : vector<8xf32> to vector<8x1xf32>
    %47 = tpu.concatenate %43, %46 in 1 : vector<8x1xf32>, vector<8x1xf32> -> vector<8x2xf32>
    %c0_49 = arith.constant 0 : index
    %c0_50 = arith.constant 0 : index
    %c0_51 = arith.constant 0 : index
    %c0_52 = arith.constant 0 : index
    %48 = vector.load %arg5[%c0_49, %c0_50, %c0_51, %c0_52] : memref<1x1x8x2xf32, #tpu.memory_space<vmem>>, vector<1x1x8x2xf32>
    %49 = vector.shape_cast %48 : vector<1x1x8x2xf32> to vector<8x2xf32>
    %50 = vector.shape_cast %47 : vector<8x2xf32> to vector<1x1x8x2xf32>
    tpu.vector_store %arg5[%c0_49, %c0_50, %c0_51, %c0_52], %50 {strides = array<i32>} : memref<1x1x8x2xf32, #tpu.memory_space<vmem>>, vector<1x1x8x2xf32>,
    return
  }
  func.func @transform_0(%arg0: i32, %arg1: i32) -> (i32, i32, i32, i32) {
    %c0_i32 = arith.constant 0 : i32
    %c0_i32_0 = arith.constant 0 : i32
    %c0_i32_1 = arith.constant 0 : i32
    return %arg0, %arg1, %c0_i32, %c0_i32_0 : i32, i32, i32, i32
  }
  func.func @transform_1(%arg0: i32, %arg1: i32) -> (i32, i32) {
    %c0_i32 = arith.constant 0 : i32
    %c0_i32_0 = arith.constant 0 : i32
    %c0_i32_1 = arith.constant 0 : i32
    return %c0_i32, %c0_i32_0 : i32, i32
  }
  func.func @transform_2(%arg0: i32, %arg1: i32) -> (i32, i32) {
    %c0_i32 = arith.constant 0 : i32
    %c0_i32_0 = arith.constant 0 : i32
    %c0_i32_1 = arith.constant 0 : i32
    return %c0_i32, %c0_i32_0 : i32, i32
  }
  func.func @transform_3(%arg0: i32, %arg1: i32) -> (i32, i32, i32, i32) {
    %c0_i32 = arith.constant 0 : i32
    %c0_i32_0 = arith.constant 0 : i32
    %c0_i32_1 = arith.constant 0 : i32
    return %arg0, %arg1, %c0_i32, %c0_i32_0 : i32, i32, i32, i32
  }
}

</mosaic_0001>

<llo_original>
// kernel: tpu_custom_call.1
$region0: #{tpu_custom_call.1}
  #allocation0 [shape = 'u32[]', space=smem, size = 0x4, offset = 0x4, fixed_abs, tag = 'smem constant byte address 0x4 - core index']
  #allocation1 [shape = 'u32[144,128]{1,0:T(1,128)}', space=vmem, size = 0x12000, scoped, tag = 'internal scratch']
  #allocation2 [shape = 'bf16[144,128]{1,0:T(16,128)(2,1)}', space=vmem, size = 0x9000, scoped, tag = 'scratch operand']
  %s0 = inlined_call_operand.hbm [shape: bf16[2,2,16,162], index: 0, kind: input, shape index: {}]
  %s1 = inlined_call_operand.hbm [shape: bf16[8,144], index: 1, kind: input, shape index: {}]
  %s2 = inlined_call_operand.vmem [shape: bf16[3,128], index: 2, kind: input, shape index: {}]
  %s3 = inlined_call_operand.vmem [shape: f32[2,2,8,2], index: 3, kind: output, shape index: {}]
  %s4 = sld [smem:[#allocation0]]
  $region53: #{tpu_custom_call.1} parent=0
    _
  %s6 = ssub.s32 1, %s4
  %s7 = scalar_select 0, %s6, %s4
  $region1: #{tpu_custom_call.1} parent=0
    #allocation3 [shape = 'u8[16384]{0}', space=vmem, size = 0x4000, scoped, tag = 'input window, operand 0']
    #allocation4 [shape = 's32[2]{0}', space=sflag, size = 0x8, scoped, tag = 'scoped memory for tpu_custom_call.1']
    #allocation5 [shape = 'u8[4096]{0}', space=vmem, size = 0x1000, scoped, tag = 'input window, operand 1, single buffered']
    #allocation6 [shape = 's32[1]{0}', space=sflag, size = 0x4, scoped, tag = 'scoped memory for tpu_custom_call.1']
    %8 = vsyncpa [#allocation4], 0
    %s9 = scalar_lea.sflag [#allocation4], 1
    %10 = vsyncpa %s9, 0
    %11 = vsyncpa [#allocation6], 0
    loop: start=0, step=1, limit=6
    $region2: #{tpu_custom_call.1} parent=1 // loop_pre_header
      _
    $region3: #{tpu_custom_call.1} parent=1 // loop_header
      %s13 = sphi 0, %s17
      %p14 = scmp.ge.s32.totalorder %s13, 6
      %s20 = sphi 0, %s32
      %s21 = sphi 0, %s28
      %s22 = sphi 0, %s20
      %s23 = sphi 0, %s21
      %s24 = sphi 0, %s22
      %s25 = sphi 0, %s23
      %s37 = sphi 0, %s39
      %s40 = sphi 0, %s37
      %s41 = sphi 0, %s40
      %s57 = sphi 0, %s41
      %s61 = sphi 0, %s61
      %s63 = sphi 0, %s61
      %s64 = sphi 0, %s63
      %s78 = sphi 0, %s64
      %s82 = sphi 0, %s82
      %s84 = sphi 0, %s82
      %s85 = sphi 0, %s84
      %s99 = sphi 0, %s85
      %s107 = sphi 0, %s109
      %s110 = sphi 0, %s107
      %s111 = sphi 0, %s110
      %s127 = sphi 0, %s111
    $region4: #{tpu_custom_call.1} parent=1 // loop_header_branch
      %16 = sbr.rel (%p14) target = $region8
    $region5: #{tpu_custom_call.1} parent=1 // loop_body
      %s18 = ssub.s32 %s13, 1
      %s19 = ssub.s32 %s13, 2
      %s26 = sadd.s32 1, %s21
      %p27 = scmp.ge.s32.totalorder %s26, 2
      %s28 = scalar_select %p27, 0, %s26
      %s29 = sadd.s32 1, %s20
      %s30 = scalar_select %p27, %s29, %s20
      %p31 = scmp.ge.s32.totalorder %s30, 2
      %s32 = scalar_select %p31, 0, %s30
      %s33 = ssub.s32 %s20, %s32
      %s34 = ssub.s32 %s21, %s28
      %s35 = sor.u32 %s33, %s34
      %p36 = scmp.eq.s32.totalorder %s35, 0
      %s38 = sadd.s32 %s37, 1
      %s39 = scalar_select %p36, %s37, %s38
      %p42 = pneg %p36
      %p43 = scmp.eq.s32.totalorder %s13, 3
      %p44 = por %p42, %p43
      %p45 = scmp.ne.s32.totalorder %s37, %s40
      %p46 = scmp.eq.s32.totalorder %s13, 0
      %p47 = por %p45, %p46
      %p48 = scmp.ne.s32.totalorder %s37, %s40
      %p49 = scmp.eq.s32.totalorder %s18, 3
      %p50 = por %p48, %p49
      %p51 = scmp.ne.s32.totalorder %s40, %s41
      %p52 = scmp.eq.s32.totalorder %s18, 0
      %p53 = por %p51, %p52
      %p54 = scmp.ne.s32.totalorder %s40, %s41
      %p55 = scmp.eq.s32.totalorder %s19, 3
      %p56 = por %p54, %p55
      %p58 = scmp.ne.s32.totalorder %s41, %s57
      %p59 = scmp.eq.s32.totalorder %s19, 0
      %p60 = por %p58, %p59
      %s62 = sadd.s32 %s61, 1
      %p65 = scmp.eq.s32.totalorder %s13, 3
      %p66 = scmp.ne.s32.totalorder %s61, %s63
      %p67 = scmp.eq.s32.totalorder %s13, 0
      %p68 = por %p66, %p67
      %p69 = scmp.ne.s32.totalorder %s61, %s63
      %p70 = scmp.eq.s32.totalorder %s18, 3
      %p71 = por %p69, %p70
      %p72 = scmp.ne.s32.totalorder %s63, %s64
      %p73 = scmp.eq.s32.totalorder %s18, 0
      %p74 = por %p72, %p73
      %p75 = scmp.ne.s32.totalorder %s63, %s64
      %p76 = scmp.eq.s32.totalorder %s19, 3
      %p77 = por %p75, %p76
      %p79 = scmp.ne.s32.totalorder %s64, %s78
      %p80 = scmp.eq.s32.totalorder %s19, 0
      %p81 = por %p79, %p80
      %s83 = sadd.s32 %s82, 1
      %p86 = scmp.eq.s32.totalorder %s13, 3
      %p87 = scmp.ne.s32.totalorder %s82, %s84
      %p88 = scmp.eq.s32.totalorder %s13, 0
      %p89 = por %p87, %p88
      %p90 = scmp.ne.s32.totalorder %s82, %s84
      %p91 = scmp.eq.s32.totalorder %s18, 3
      %p92 = por %p90, %p91
      %p93 = scmp.ne.s32.totalorder %s84, %s85
      %p94 = scmp.eq.s32.totalorder %s18, 0
      %p95 = por %p93, %p94
      %p96 = scmp.ne.s32.totalorder %s84, %s85
      %p97 = scmp.eq.s32.totalorder %s19, 3
      %p98 = por %p96, %p97
      %p100 = scmp.ne.s32.totalorder %s85, %s99
      %p101 = scmp.eq.s32.totalorder %s19, 0
      %p102 = por %p100, %p101
      %s103 = ssub.s32 %s20, %s32
      %s104 = ssub.s32 %s21, %s28
      %s105 = sor.u32 %s103, %s104
      %p106 = scmp.eq.s32.totalorder %s105, 0
      %s108 = sadd.s32 %s107, 1
      %s109 = scalar_select %p106, %s107, %s108
      %p112 = pneg %p106
      %p113 = scmp.eq.s32.totalorder %s13, 3
      %p114 = por %p112, %p113
      %p115 = scmp.ne.s32.totalorder %s107, %s110
      %p116 = scmp.eq.s32.totalorder %s13, 0
      %p117 = por %p115, %p116
      %p118 = scmp.ne.s32.totalorder %s107, %s110
      %p119 = scmp.eq.s32.totalorder %s18, 3
      %p120 = por %p118, %p119
      %p121 = scmp.ne.s32.totalorder %s110, %s111
      %p122 = scmp.eq.s32.totalorder %s18, 0
      %p123 = por %p121, %p122
      %p124 = scmp.ne.s32.totalorder %s110, %s111
      %p125 = scmp.eq.s32.totalorder %s19, 3
      %p126 = por %p124, %p125
      %p128 = scmp.ne.s32.totalorder %s111, %s127
      %p129 = scmp.eq.s32.totalorder %s19, 0
      %p130 = por %p128, %p129
      %p131 = scmp.le.s32.totalorder 1, %s13
      %p132 = scmp.lt.s32.totalorder %s13, 5
      %p133 = pnand %p131, %p132
      %p134 = pneg %p133
      // Predicated region
      $region9: #{tpu_custom_call.1} parent=5 // pred_check
        _
      $region10: #{tpu_custom_call.1} parent=5 // pred_check_branch
        %136 = sbr.rel (%p133) target = $region12
      $region11: #{tpu_custom_call.1} parent=5 // pred_region
        %s137 = ssub.s32 %s13, 1
        // Predicated region
        $region13: #{tpu_custom_call.1} parent=11 // pred_check
          %p138 = pneg %p74
        $region14: #{tpu_custom_call.1} parent=11 // pred_check_branch
          %140 = sbr.rel (%p138) target = $region16
        $region15: #{tpu_custom_call.1} parent=11 // pred_region
          %s142 = ssub.s32 128, 128
          %143 = vsyncadd [#allocation6], %s142
          %s145 = sshll.u32 [#allocation5], 4
          %s146 = int_to_ptr.vmem [resolvable:$true] %s145
          %148 = dma.hbm_to_vmem [thread:$0]  %s1, 128, %s146, [#allocation6]
        $region16: #{tpu_custom_call.1} parent=11 // pred_fallthru
          _
        // Predicated region
        $region17: #{tpu_custom_call.1} parent=11 // pred_check
          %p149 = pneg %p95
        $region18: #{tpu_custom_call.1} parent=11 // pred_check_branch
          %151 = sbr.rel (%p149) target = $region20
        $region19: #{tpu_custom_call.1} parent=11 // pred_region
          _
        $region20: #{tpu_custom_call.1} parent=11 // pred_fallthru
          _
      $region12: #{tpu_custom_call.1} parent=5 // pred_fallthru
        _
      %p152 = scmp.lt.s32.totalorder %s13, 4
      // Predicated region
      $region21: #{tpu_custom_call.1} parent=5 // pred_check
        %p153 = pneg %p152
      $region22: #{tpu_custom_call.1} parent=5 // pred_check_branch
        %155 = sbr.rel (%p153) target = $region24
      $region23: #{tpu_custom_call.1} parent=5 // pred_region
        // Predicated region
        $region25: #{tpu_custom_call.1} parent=23 // pred_check
          %p156 = pneg %p47
        $region26: #{tpu_custom_call.1} parent=23 // pred_check_branch
          %158 = sbr.rel (%p156) target = $region28
        $region27: #{tpu_custom_call.1} parent=23 // pred_region
          %s159 = sand.u32 %s37, 1
          %s160 = scalar_lea.sflag [#allocation4], %s159
          %s161 = sand.u32 %s37, 1
          %s162 = smul.addr %s161, 16
          %s163 = scalar_lea.vmem [#allocation3], %s162
          %s165 = ssub.s32 256, 256
          %166 = vsyncadd %s160, %s165
          %s167 = smul.addr %s21, 4
          %s168 = smul.addr %s20, 8
          %s169 = sadd.s32 %s167, %s168
          %s170 = smul.addr %s169, 64
          %s171 = scalar_lea.hbm %s0, %s170
          %s172 = sshll.u32 %s163, 4
          %s173 = int_to_ptr.vmem [resolvable:$true] %s172
          %178 = dma.hbm_to_vmem [thread:$0]  %s171, 256, %s173, %s160, 128, 128, 8
        $region28: #{tpu_custom_call.1} parent=23 // pred_fallthru
          _
      $region24: #{tpu_custom_call.1} parent=5 // pred_fallthru
        _
      %p179 = scmp.le.s32.totalorder 1, %s13
      %p180 = scmp.lt.s32.totalorder %s13, 5
      %p181 = pnand %p179, %p180
      %p182 = pneg %p181
      // Predicated region
      $region29: #{tpu_custom_call.1} parent=5 // pred_check
        _
      $region30: #{tpu_custom_call.1} parent=5 // pred_check_branch
        %184 = sbr.rel (%p181) target = $region32
      $region31: #{tpu_custom_call.1} parent=5 // pred_region
        %s185 = ssub.s32 %s13, 1
        %s186 = sand.u32 %s40, 1
        %s187 = scalar_lea.sflag [#allocation4], %s186
        %s188 = sand.u32 %s40, 1
        %s189 = smul.addr %s188, 16
        %s190 = scalar_lea.vmem [#allocation3], %s189
        // Predicated region
        $region33: #{tpu_custom_call.1} parent=31 // pred_check
          %p191 = pneg %p53
        $region34: #{tpu_custom_call.1} parent=31 // pred_check_branch
          %193 = sbr.rel (%p191) target = $region36
        $region35: #{tpu_custom_call.1} parent=31 // pred_region
          %194 = dma.done %s187, 256
        $region36: #{tpu_custom_call.1} parent=31 // pred_fallthru
          _
        // Predicated region
        $region37: #{tpu_custom_call.1} parent=31 // pred_check
          %p195 = pneg %p74
        $region38: #{tpu_custom_call.1} parent=31 // pred_check_branch
          %197 = sbr.rel (%p195) target = $region40
        $region39: #{tpu_custom_call.1} parent=31 // pred_region
          %198 = dma.done [#allocation6], 128
        $region40: #{tpu_custom_call.1} parent=31 // pred_fallthru
          _
        %s199 = sand.u32 %s40, 1
        %s200 = scalar_lea.sflag [#allocation4], %s199
        %s201 = sand.u32 %s40, 1
        %s202 = smul.addr %s201, 16
        %s203 = scalar_lea.vmem [#allocation3], %s202
        %p204 = pneg %p53
        %p205 = pneg %p50
        %p206 = pneg %p74
        %p207 = pneg %p71
        %p208 = pneg %p95
        %p209 = pneg %p92
        %p210 = pneg %p123
        %p211 = pneg %p120
        %p212 = scmp.lt.s32.totalorder %s22, 1
        %s213 = scalar_select %p212, %s22, 1
        %p214 = scmp.lt.s32.totalorder %s23, 1
        %s215 = scalar_select %p214, %s23, 1
        %s216 = smul.addr %s213, 2
        %s217 = sadd.s32 %s215, %s216
        %s218 = smul.addr %s217, 8
        %s219 = scalar_lea.vmem %s3, %s218
        %p220 = scmp.lt.s32.totalorder %s22, 1
        %s221 = scalar_select %p220, %s22, 1
        %p222 = scmp.lt.s32.totalorder %s23, 1
        %s223 = scalar_select %p222, %s23, 1
        %s224 = smul.addr %s221, 2
        %s225 = sadd.s32 %s223, %s224
        %s226 = smul.addr %s225, 8
        %s227 = scalar_lea.vmem %s3, %s226
        %v229 = vld [vmem:[%s2] sm:$0x1]
        %v231 = vpack.i.b16 %v229, %v229
        %v233 = vlaneseq
        %v234 = vshrl.u32 %v233, 7
        %v235 = vsub.s32 0, %v234
        %v236 = vrot.slane %v231, %v235
        %v237 = vld [vmem:[%s2] sm:$0x2]
        %v239 = vpack.i.b16 %v237, %v237
        %v241 = vlaneseq
        %v242 = vshrl.u32 %v241, 7
        %v243 = vsub.s32 1, %v242
        %v244 = vrot.slane %v239, %v243
        %v245 = vld [vmem:[%s190] sm:$0xf]
        %v246 = vld [vmem:[%s190 + $0x8] sm:$0xf]
        %v248 = vunpack.c.l.b16 %v236
        %v249 = vpack.c.b16 %v248, %v248
        %v251 = vmul.bf16 %v245, %v249
        %v252 = vmul.bf16 %v246, %v249
        %v255 = vunpack.c.l.b16 %v251
        %v256 = vunpack.c.l.b16 %v252
        %v257 = vpack.c.b16 %v256, %v255
        %259 = vst [vmem:[#allocation2] sm:$0xff] %v257
        %v260 = vld [vmem:[%s190] sm:$0xff]
        %v261 = vld [vmem:[%s190 + $0x8] sm:$0xff]
        %v264 = vunpack.c.l.b16 %v260
        %v265 = vunpack.c.h.b16 %v260
        %v266 = vunpack.c.l.b16 %v261
        %v267 = vunpack.c.h.b16 %v261
        %v268 = vpack.c.b16 %v266, %v264
        %v269 = vpack.c.b16 %v267, %v265
        %270 = vrot.lane.b32.xlu0 %v268, 127
        %v271 = vpop.permute.xlu0 %270
        %272 = vrot.lane.b32.xlu0 %v269, 127
        %v273 = vpop.permute.xlu0 %272
        %vm274 = vcmask 1039360
        %v275 = vsel %vm274, %v271, %v273
        %277 = vst [vmem:[#allocation2 + $0x8] sm:$0xff] %v275
        %v278 = vld [vmem:[%s190] sm:$0xff]
        %v279 = vld [vmem:[%s190 + $0x8] sm:$0xff]
        %v281 = vunpack.c.l.b16 %v244
        %v282 = vpack.c.b16 %v281, %v281
        %283 = vrot.lane.b32.xlu0 %v282, 2
        %v284 = vpop.permute.xlu0 %283
        %v285 = vrot.slane %v284, 4
        %vm286 = vcmask 15360
        %v287 = vsel %vm286, %v285, %v284
        %v289 = vmul.bf16 %v278, %v287
        %v290 = vmul.bf16 %v279, %v287
        %v293 = vunpack.c.l.b16 %v289
        %v294 = vunpack.c.h.b16 %v289
        %v295 = vunpack.c.l.b16 %v290
        %v296 = vunpack.c.h.b16 %v290
        %v297 = vpack.c.b16 %v295, %v293
        %v298 = vpack.c.b16 %v296, %v294
        %299 = vrot.lane.b32.xlu0 %v297, 126
        %v300 = vpop.permute.xlu0 %299
        %301 = vrot.lane.b32.xlu0 %v298, 126
        %v302 = vpop.permute.xlu0 %301
        %vm303 = vcmask 1031168
        %v304 = vsel %vm303, %v300, %v302
        %306 = vst [vmem:[#allocation2 + $0x10] sm:$0xff] %v304
        %v307 = vld [vmem:[%s190] sm:$0xff]
        %v308 = vld [vmem:[%s190 + $0x8] sm:$0xff]
        %309 = vrot.lane.b32.xlu0 %v249, 16
        %v310 = vpop.permute.xlu0 %309
        %v311 = vrot.slane %v310, 4
        %vm312 = vcmask 130048
        %v313 = vsel %vm312, %v311, %v310
        %v315 = vmul.bf16 %v307, %v313
        %v316 = vmul.bf16 %v308, %v313
        %v319 = vunpack.c.l.b16 %v315
        %v320 = vunpack.c.h.b16 %v315
        %v321 = vunpack.c.l.b16 %v316
        %v322 = vunpack.c.h.b16 %v316
        %v323 = vpack.c.b16 %v321, %v319
        %v324 = vpack.c.b16 %v322, %v320
        %325 = vrot.lane.b32.xlu0 %v323, 112
        %v326 = vpop.permute.xlu0 %325
        %327 = vrot.lane.b32.xlu0 %v324, 112
        %v328 = vpop.permute.xlu0 %327
        %vm329 = vcmask 916480
        %v330 = vsel %vm329, %v326, %v328
        %332 = vst [vmem:[#allocation2 + $0x18] sm:$0xff] %v330
        %v333 = vld [vmem:[%s190] sm:$0xff]
        %v334 = vld [vmem:[%s190 + $0x8] sm:$0xff]
        %v337 = vunpack.c.l.b16 %v333
        %v338 = vunpack.c.h.b16 %v333
        %v339 = vunpack.c.l.b16 %v334
        %v340 = vunpack.c.h.b16 %v334
        %v341 = vpack.c.b16 %v339, %v337
        %v342 = vpack.c.b16 %v340, %v338
        %343 = vrot.lane.b32.xlu0 %v341, 111
        %v344 = vpop.permute.xlu0 %343
        %345 = vrot.lane.b32.xlu0 %v342, 111
        %v346 = vpop.permute.xlu0 %345
        %vm347 = vcmask 908288
        %v348 = vsel %vm347, %v344, %v346
        %350 = vst [vmem:[#allocation2 + $0x20] sm:$0xff] %v348
        %v351 = vld [vmem:[%s190] sm:$0xff]
        %v352 = vld [vmem:[%s190 + $0x8] sm:$0xff]
        %353 = vrot.lane.b32.xlu0 %v282, 18
        %v354 = vpop.permute.xlu0 %353
        %v355 = vrot.slane %v354, 4
        %vm356 = vcmask 146432
        %v357 = vsel %vm356, %v355, %v354
        %v359 = vmul.bf16 %v351, %v357
        %v360 = vmul.bf16 %v352, %v357
        %v363 = vunpack.c.l.b16 %v359
        %v364 = vunpack.c.h.b16 %v359
        %v365 = vunpack.c.l.b16 %v360
        %v366 = vunpack.c.h.b16 %v360
        %v367 = vpack.c.b16 %v365, %v363
        %v368 = vpack.c.b16 %v366, %v364
        %369 = vrot.lane.b32.xlu0 %v367, 110
        %v370 = vpop.permute.xlu0 %369
        %371 = vrot.lane.b32.xlu0 %v368, 110
        %v372 = vpop.permute.xlu0 %371
        %vm373 = vcmask 900096
        %v374 = vsel %vm373, %v370, %v372
        %376 = vst [vmem:[#allocation2 + $0x28] sm:$0xff] %v374
        %v377 = vld [vmem:[%s190] sm:$0xff]
        %v378 = vld [vmem:[%s190 + $0x8] sm:$0xff]
        %379 = vrot.lane.b32.xlu0 %v249, 32
        %v380 = vpop.permute.xlu0 %379
        %v381 = vrot.slane %v380, 4
        %vm382 = vcmask 261120
        %v383 = vsel %vm382, %v381, %v380
        %v385 = vmul.bf16 %v377, %v383
        %v386 = vmul.bf16 %v378, %v383
        %v389 = vunpack.c.l.b16 %v385
        %v390 = vunpack.c.h.b16 %v385
        %v391 = vunpack.c.l.b16 %v386
        %v392 = vunpack.c.h.b16 %v386
        %v393 = vpack.c.b16 %v391, %v389
        %v394 = vpack.c.b16 %v392, %v390
        %395 = vrot.lane.b32.xlu0 %v393, 96
        %v396 = vpop.permute.xlu0 %395
        %397 = vrot.lane.b32.xlu0 %v394, 96
        %v398 = vpop.permute.xlu0 %397
        %vm399 = vcmask 785408
        %v400 = vsel %vm399, %v396, %v398
        %402 = vst [vmem:[#allocation2 + $0x30] sm:$0xff] %v400
        %v403 = vld [vmem:[%s190] sm:$0xff]
        %v404 = vld [vmem:[%s190 + $0x8] sm:$0xff]
        %v407 = vunpack.c.l.b16 %v403
        %v408 = vunpack.c.h.b16 %v403
        %v409 = vunpack.c.l.b16 %v404
        %v410 = vunpack.c.h.b16 %v404
        %v411 = vpack.c.b16 %v409, %v407
        %v412 = vpack.c.b16 %v410, %v408
        %413 = vrot.lane.b32.xlu0 %v411, 95
        %v414 = vpop.permute.xlu0 %413
        %415 = vrot.lane.b32.xlu0 %v412, 95
        %v416 = vpop.permute.xlu0 %415
        %vm417 = vcmask 777216
        %v418 = vsel %vm417, %v414, %v416
        %420 = vst [vmem:[#allocation2 + $0x38] sm:$0xff] %v418
        %v421 = vld [vmem:[%s190] sm:$0xff]
        %v422 = vld [vmem:[%s190 + $0x8] sm:$0xff]
        %423 = vrot.lane.b32.xlu0 %v282, 34
        %v424 = vpop.permute.xlu0 %423
        %v425 = vrot.slane %v424, 4
        %vm426 = vcmask 277504
        %v427 = vsel %vm426, %v425, %v424
        %v429 = vmul.bf16 %v421, %v427
        %v430 = vmul.bf16 %v422, %v427
        %v433 = vunpack.c.l.b16 %v429
        %v434 = vunpack.c.h.b16 %v429
        %v435 = vunpack.c.l.b16 %v430
        %v436 = vunpack.c.h.b16 %v430
        %v437 = vpack.c.b16 %v435, %v433
        %v438 = vpack.c.b16 %v436, %v434
        %439 = vrot.lane.b32.xlu0 %v437, 94
        %v440 = vpop.permute.xlu0 %439
        %441 = vrot.lane.b32.xlu0 %v438, 94
        %v442 = vpop.permute.xlu0 %441
        %vm443 = vcmask 769024
        %v444 = vsel %vm443, %v440, %v442
        %446 = vst [vmem:[#allocation2 + $0x40] sm:$0xff] %v444
        %v447 = vld [vmem:[#allocation5] sm:$0xff]
        %v448 = vld [vmem:[#allocation2] sm:$0xff]
        %v449 = vld [vmem:[#allocation2 + $0x8] sm:$0xff]
        %v450 = vld [vmem:[#allocation2 + $0x10] sm:$0xff]
        %v451 = vld [vmem:[#allocation2 + $0x18] sm:$0xff]
        %v452 = vld [vmem:[#allocation2 + $0x20] sm:$0xff]
        %v453 = vld [vmem:[#allocation2 + $0x28] sm:$0xff]
        %v454 = vld [vmem:[#allocation2 + $0x30] sm:$0xff]
        %v455 = vld [vmem:[#allocation2 + $0x38] sm:$0xff]
        %v456 = vld [vmem:[#allocation2 + $0x40] sm:$0xff]
        %v458 = vunpack.c.l.b16 %v447
        %v459 = vunpack.c.h.b16 %v447
        %v460 = vpack.c.b16 %v458, %v458
        %v461 = vpack.c.b16 %v459, %v459
        %vm463 = vcmask 130048
        %v465 = vsel %vm463, %v461, 0
        %467 = vmatprep.subr.bf16.mxu0 0
        %468 = vmatpush1.bf16.msra.mxu0 %v448
        %469 = vmatprep.subr.bf16.mxu0 0
        %470 = vmatpush1.bf16.msra.mxu0 %v449
        %471 = vmatprep.subr.bf16.mxu0 0
        %472 = vmatpush1.bf16.msra.mxu0 %v450
        %473 = vmatprep.subr.bf16.mxu0 0
        %474 = vmatpush1.bf16.msra.mxu0 %v451
        %475 = vmatprep.subr.bf16.mxu0 0
        %476 = vmatpush1.bf16.msra.mxu0 %v452
        %477 = vmatprep.subr.bf16.mxu0 0
        %478 = vmatpush1.bf16.msra.mxu0 %v453
        %479 = vmatprep.subr.bf16.mxu0 0
        %480 = vmatpush1.bf16.msra.mxu0 %v454
        %481 = vmatprep.subr.bf16.mxu0 0
        %482 = vmatpush1.bf16.msra.mxu0 %v455
        %483 = vmatprep.subr.bf16.mxu0 0
        %484 = vmatpush1.bf16.msra.mxu0 %v456
        %485 = vmatprep.subr.bf16.mxu0 0
        %486 = vmatpush1.bf16.msra.mxu0 0
        %487 = vmatprep.subr.bf16.mxu0 0
        %488 = vmatpush1.bf16.msra.mxu0 0
        %489 = vmatprep.subr.bf16.mxu0 0
        %490 = vmatpush1.bf16.msra.mxu0 0
        %491 = vmatprep.subr.bf16.mxu0 0
        %492 = vmatpush1.bf16.msra.mxu0 0
        %493 = vmatprep.subr.bf16.mxu0 0
        %494 = vmatpush1.bf16.msra.mxu0 0
        %495 = vmatprep.subr.bf16.mxu0 0
        %496 = vmatpush1.bf16.msra.mxu0 0
        %497 = vmatprep.subr.bf16.mxu0 0
        %498 = vmatpush1.bf16.msra.mxu0 0
        %499 = vmatprep.mubr.bf16.mxu0 %v465
        %500 = vmatmul.mubr.bf16.gmra.mrb[0].mxu0 %v460
        %v501 = vpop.f32.mrb[0].mxu0
        %v502 = vadd.f32 0.0, %v501
        %v503 = vpop.f32.mrb[0].mxu0
        %v504 = vpop.f32.mrb[0].mxu0
        %v505 = vpop.f32.mrb[0].mxu0
        %506 = vdwg.mxu0
        %507 = vadd.xlane.f32.xlu0 %v502
        %v508 = vpop.xlane.xlu0 %507
        %v509 = vmul.f32 %v502, %v502
        %510 = vadd.xlane.f32.xlu0 %v509
        %v511 = vpop.xlane.xlu0 %510
        %vm512 = vcmask 7168
        %v513 = vsel %vm512, %v508, %v511
        %vm514 = vcmask 15360
        %515 = vst.msk [vmem:[%s227] sm:$0xff] %vm514, %v513
        %p516 = scmp.lt.s32.totalorder %s22, 1
        %s517 = scalar_select %p516, %s22, 1
        %p518 = scmp.lt.s32.totalorder %s23, 1
        %s519 = scalar_select %p518, %s23, 1
        %s520 = smul.addr %s517, 2
        %s521 = sadd.s32 %s519, %s520
        %s522 = smul.addr %s521, 8
        %s523 = scalar_lea.vmem %s3, %s522
        // Predicated region
        $region41: #{tpu_custom_call.1} parent=31 // pred_check
          %p524 = pneg %p120
        $region42: #{tpu_custom_call.1} parent=31 // pred_check_branch
          %526 = sbr.rel (%p524) target = $region44
        $region43: #{tpu_custom_call.1} parent=31 // pred_region
          _
        $region44: #{tpu_custom_call.1} parent=31 // pred_fallthru
          _
      $region32: #{tpu_custom_call.1} parent=5 // pred_fallthru
        _
      %p527 = scmp.le.s32.totalorder 2, %s13
      // Predicated region
      $region45: #{tpu_custom_call.1} parent=5 // pred_check
        %p528 = pneg %p527
      $region46: #{tpu_custom_call.1} parent=5 // pred_check_branch
        %530 = sbr.rel (%p528) target = $region48
      $region47: #{tpu_custom_call.1} parent=5 // pred_region
        %s531 = ssub.s32 %s13, 2
        // Predicated region
        $region49: #{tpu_custom_call.1} parent=47 // pred_check
          %p532 = pneg %p126
        $region50: #{tpu_custom_call.1} parent=47 // pred_check_branch
          %534 = sbr.rel (%p532) target = $region52
        $region51: #{tpu_custom_call.1} parent=47 // pred_region
          %p535 = scmp.lt.s32.totalorder %s24, 1
          %s536 = scalar_select %p535, %s24, 1
          %p537 = scmp.lt.s32.totalorder %s25, 1
          %s538 = scalar_select %p537, %s25, 1
          %s539 = smul.addr %s536, 2
          %s540 = sadd.s32 %s538, %s539
          %s541 = smul.addr %s540, 8
          %s542 = scalar_lea.vmem %s3, %s541
        $region52: #{tpu_custom_call.1} parent=47 // pred_fallthru
          _
      $region48: #{tpu_custom_call.1} parent=5 // pred_fallthru
        _
    $region6: #{tpu_custom_call.1} parent=1 // loop_footer
      %s17 = sadd.s32 1, %s13
    $region7: #{tpu_custom_call.1} parent=1 // loop_footer_branch
      %12 = sbr.rel target = $region3
    $region8: #{tpu_custom_call.1} parent=1 // loop_exit
      _
    %543 = vsyncpa [#allocation4], 1
    %s544 = scalar_lea.sflag [#allocation4], 1
    %545 = vsyncpa %s544, 1
    %546 = vsyncpa [#allocation6], 1

</llo_original>
